<compile_context>
chip_gen: v7x
topology: tpu7x:2x2x1
jax: 0.10.0
libtpu: 0.0.40
codegen_flags: <defaults>
</compile_context>

<pallas_src>
import jax
import jax.numpy as jnp
from jax.experimental import pallas as pl
from jax.experimental.pallas import tpu as pltpu  # noqa: F401  (TPU backend)

B_PAD = 8       # sublane-aligned batch tile
K_PAD = 8       # contraction pad (full-array block; < 128 is fine when == array dim)
OUT_PAD = 128   # lane-aligned output features (keeps the store lane-dense)


def _linear_add_kernel(x_ref, wt_ref, b_ref, other_ref, out_ref):
    # x_ref:     (B_PAD, K_PAD)
    # wt_ref:    (K_PAD, OUT_PAD)   (already-transposed, pre-padded weight)
    # b_ref:     (1, OUT_PAD)       broadcast-added on the VPU
    # other_ref: (1, OUT_PAD)       broadcast-added on the VPU
    # out_ref:   (B_PAD, OUT_PAD)
    acc = jnp.dot(x_ref[...], wt_ref[...], preferred_element_type=jnp.float32)
    out_ref[...] = acc + b_ref[...] + other_ref[...]


# Grid-less pallas_call: each operand is a single whole-array VMEM block; the
# problem is ~100 FLOPs so we want zero pipeline/loop scaffolding.
_linear_add_call = pl.pallas_call(
    _linear_add_kernel,
    out_shape=jax.ShapeDtypeStruct((B_PAD, OUT_PAD), jnp.float32),
)


def make_linear_add(weight, bias):
    """Build a jitted forward for fixed Linear(in=3, out=4) parameters.

    Static parameter padding (weight.T and bias) happens exactly once here,
    not on every call.
    """
    out_f, in_f = weight.shape
    wt_pad = jnp.zeros((K_PAD, OUT_PAD), jnp.float32).at[:in_f, :out_f].set(weight.T)
    b_pad = jnp.zeros((1, OUT_PAD), jnp.float32).at[:, :out_f].set(bias[None, :])

    @jax.jit
    def forward(x1, other):
        B, IN = x1.shape
        OUT = other.shape[-1]
        # Only the activations are padded per call; these two small ops fuse
        # under jit (zero K-padding keeps the matmul exact on the valid region).
        x_pad = jnp.zeros((B_PAD, K_PAD), jnp.float32).at[:B, :IN].set(x1)
        o_pad = jnp.zeros((1, OUT_PAD), jnp.float32).at[:, :OUT].set(
            jnp.broadcast_to(other, (1, OUT)))
        out_pad = _linear_add_call(x_pad, wt_pad, b_pad, o_pad)
        return out_pad[:B, :OUT]

    return forward


if __name__ == "__main__":
    key = jax.random.PRNGKey(0)
    k_x, k_o, k_w, k_b = jax.random.split(key, 4)

    # module-implied small shapes
    x1 = jax.random.normal(k_x, (1, 3), jnp.float32)
    other = jax.random.normal(k_o, (1, 4), jnp.float32)

    # deterministic Linear(3, 4) parameters
    weight = jax.random.normal(k_w, (4, 3), jnp.float32) * 0.1
    bias = jax.random.normal(k_b, (4,), jnp.float32) * 0.1

    forward = make_linear_add(weight, bias)
    out = forward(x1, other)
    jax.block_until_ready(out)

    # reference check (plain JAX)
    ref = x1 @ weight.T + bias[None, :] + other
    assert out.shape == (1, 4)
    assert jnp.allclose(out, ref, atol=1e-5), (out, ref)

    print("KERNEL_OK")
</pallas_src>

<mosaic_0001>
module attributes {stable_mosaic.version = 11 : i64} {
  func.func @_linear_add_kernel(%arg0: memref<8x8xf32, #tpu.memory_space<vmem>>, %arg1: memref<8x128xf32, #tpu.memory_space<vmem>>, %arg2: memref<1x128xf32, #tpu.memory_space<vmem>>, %arg3: memref<1x128xf32, #tpu.memory_space<vmem>>, %arg4: memref<8x128xf32, #tpu.memory_space<vmem>>) attributes {dimension_semantics = [], scalar_prefetch = 0 : i64, scratch_operands = 0 : i64, tpu.core_type = #tpu.core_type<tc>} {
    %c0 = arith.constant 0 : index
    %c0_0 = arith.constant 0 : index
    %0 = vector.load %arg0[%c0, %c0_0] : memref<8x8xf32, #tpu.memory_space<vmem>>, vector<8x8xf32>
    %c0_1 = arith.constant 0 : index
    %c0_2 = arith.constant 0 : index
    %1 = vector.load %arg1[%c0_1, %c0_2] : memref<8x128xf32, #tpu.memory_space<vmem>>, vector<8x128xf32>
    %cst = arith.constant dense<0.000000e+00> : vector<8x128xf32>
    %2 = tpu.matmul %0, %1, %cst {dimension_numbers = #tpu.dot_dimension_numbers<[1], [0], [0], [1], [0, 0, 1, 1], [], []>} : vector<8x8xf32>, vector<8x128xf32>, vector<8x128xf32> -> vector<8x128xf32>
    %c0_3 = arith.constant 0 : index
    %c0_4 = arith.constant 0 : index
    %3 = vector.load %arg2[%c0_3, %c0_4] : memref<1x128xf32, #tpu.memory_space<vmem>>, vector<1x128xf32>
    %4 = vector.broadcast %3 : vector<1x128xf32> to vector<8x128xf32>
    %5 = arith.addf %2, %4 : vector<8x128xf32>
    %c0_5 = arith.constant 0 : index
    %c0_6 = arith.constant 0 : index
    %6 = vector.load %arg3[%c0_5, %c0_6] : memref<1x128xf32, #tpu.memory_space<vmem>>, vector<1x128xf32>
    %7 = vector.broadcast %6 : vector<1x128xf32> to vector<8x128xf32>
    %8 = arith.addf %5, %7 : vector<8x128xf32>
    %c0_7 = arith.constant 0 : index
    %c0_8 = arith.constant 0 : index
    %9 = vector.load %arg4[%c0_7, %c0_8] : memref<8x128xf32, #tpu.memory_space<vmem>>, vector<8x128xf32>
    tpu.vector_store %arg4[%c0_7, %c0_8], %8 {strides = array<i32>} : memref<8x128xf32, #tpu.memory_space<vmem>>, vector<8x128xf32>,
    return
  }
}

</mosaic_0001>

<llo_original>
// kernel: forward.1
$region0: #{forward.1}
  #allocation0 [shape = 'u32[]', space=smem, size = 0x4, offset = 0x4, fixed_abs, tag = 'smem constant byte address 0x4 - core index']
  #allocation1 [shape = 'u32[144,128]{1,0:T(1,128)}', space=vmem, size = 0x12000, scoped, tag = 'internal scratch']
  %s0 = inlined_call_operand.vmem [shape: f32[8,8], index: 0, kind: input, shape index: {}]
  %s1 = inlined_call_operand.vmem [shape: f32[8,128], index: 1, kind: input, shape index: {}]
  %s2 = inlined_call_operand.vmem [shape: f32[1,128], index: 2, kind: input, shape index: {}]
  %s3 = inlined_call_operand.vmem [shape: f32[1,128], index: 3, kind: input, shape index: {}]
  %s4 = inlined_call_operand.vmem [shape: f32[8,128], index: 4, kind: output, shape index: {}]
  %s5 = sld [smem:[#allocation0]]
  $region26: #{forward.1} parent=0
    _
  %s7 = ssub.s32 1, %s5
  %s8 = scalar_select 0, %s7, %s5
  // Predicated region
  $region2: #{forward.1} parent=0 // pred_check
    _
  $region3: #{forward.1} parent=0 // pred_check_branch
    %10 = sbr.rel (0) target = $region5
  $region4: #{forward.1} parent=0 // pred_region
    _
  $region5: #{forward.1} parent=0 // pred_fallthru
    _
  // Predicated region
  $region6: #{forward.1} parent=0 // pred_check
    _
  $region7: #{forward.1} parent=0 // pred_check_branch
    %12 = sbr.rel (0) target = $region9
  $region8: #{forward.1} parent=0 // pred_region
    _
  $region9: #{forward.1} parent=0 // pred_fallthru
    _
  // Predicated region
  $region10: #{forward.1} parent=0 // pred_check
    _
  $region11: #{forward.1} parent=0 // pred_check_branch
    %14 = sbr.rel (0) target = $region13
  $region12: #{forward.1} parent=0 // pred_region
    _
  $region13: #{forward.1} parent=0 // pred_fallthru
    _
  // Predicated region
  $region14: #{forward.1} parent=0 // pred_check
    _
  $region15: #{forward.1} parent=0 // pred_check_branch
    %16 = sbr.rel (0) target = $region17
  $region16: #{forward.1} parent=0 // pred_region
    _
  $region17: #{forward.1} parent=0 // pred_fallthru
    _
  %v17 = vld [vmem:[%s0] sm:$0xff]
  %v18 = vld [vmem:[%s1] sm:$0xff]
  %v19 = vld [vmem:[%s2] sm:$0x1]
  %v21 = vlaneseq
  %v22 = vshrl.u32 %v21, 7
  %v23 = vsub.s32 0, %v22
  %v24 = vrot.slane %v19, %v23
  %vm26 = vcmask 64512
  %v28 = vsel %vm26, %v17, 0
  %30 = vmatprep.subr.mxu0 0.0
  %31 = vmatpush1.msra.mxu0 %v18
  %32 = vmatprep.subr.mxu0 0.0
  %33 = vmatpush1.msra.mxu0 0.0
  %34 = vmatprep.subr.mxu0 0.0
  %35 = vmatpush1.msra.mxu0 0.0
  %36 = vmatprep.subr.mxu0 0.0
  %37 = vmatpush1.msra.mxu0 0.0
  %38 = vmatprep.subr.mxu0 0.0
  %39 = vmatpush1.msra.mxu0 0.0
  %40 = vmatprep.subr.mxu0 0.0
  %41 = vmatpush1.msra.mxu0 0.0
  %42 = vmatprep.subr.mxu0 0.0
  %43 = vmatpush1.msra.mxu0 0.0
  %44 = vmatprep.subr.mxu0 0.0
  %45 = vmatpush1.msra.mxu0 0.0
  %46 = vmatprep.subr.mxu0 0.0
  %47 = vmatpush1.msra.mxu0 0.0
  %48 = vmatprep.subr.mxu0 0.0
  %49 = vmatpush1.msra.mxu0 0.0
  %50 = vmatprep.subr.mxu0 0.0
  %51 = vmatpush1.msra.mxu0 0.0
  %52 = vmatprep.subr.mxu0 0.0
  %53 = vmatpush1.msra.mxu0 0.0
  %54 = vmatprep.subr.mxu0 0.0
  %55 = vmatpush1.msra.mxu0 0.0
  %56 = vmatprep.subr.mxu0 0.0
  %57 = vmatpush1.msra.mxu0 0.0
  %58 = vmatprep.subr.mxu0 0.0
  %59 = vmatpush1.msra.mxu0 0.0
  %60 = vmatprep.subr.mxu0 0.0
  %61 = vmatpush1.msra.mxu0 0.0
  %62 = vmatprep.subr.mxu0 0.0
  %63 = vmatpush1.msra.mxu0 0.0
  %64 = vmatprep.subr.mxu0 0.0
  %65 = vmatpush1.msra.mxu0 0.0
  %66 = vmatprep.subr.mxu0 0.0
  %67 = vmatpush1.msra.mxu0 0.0
  %68 = vmatprep.subr.mxu0 0.0
  %69 = vmatpush1.msra.mxu0 0.0
  %70 = vmatprep.subr.mxu0 0.0
  %71 = vmatpush1.msra.mxu0 0.0
  %72 = vmatprep.subr.mxu0 0.0
  %73 = vmatpush1.msra.mxu0 0.0
  %74 = vmatprep.subr.mxu0 0.0
  %75 = vmatpush1.msra.mxu0 0.0
  %76 = vmatprep.subr.mxu0 0.0
  %77 = vmatpush1.msra.mxu0 0.0
  %78 = vmatprep.subr.mxu0 0.0
  %79 = vmatpush1.msra.mxu0 0.0
  %80 = vmatprep.subr.mxu0 0.0
  %81 = vmatpush1.msra.mxu0 0.0
  %82 = vmatprep.subr.mxu0 0.0
  %83 = vmatpush1.msra.mxu0 0.0
  %84 = vmatprep.subr.mxu0 0.0
  %85 = vmatpush1.msra.mxu0 0.0
  %86 = vmatprep.subr.mxu0 0.0
  %87 = vmatpush1.msra.mxu0 0.0
  %88 = vmatprep.subr.mxu0 0.0
  %89 = vmatpush1.msra.mxu0 0.0
  %90 = vmatprep.subr.mxu0 0.0
  %91 = vmatpush1.msra.mxu0 0.0
  %92 = vmatprep.subr.mxu0 0.0
  %93 = vmatpush1.msra.mxu0 0.0
  %94 = vmatprep.mubr.f32.mxu0 0.0
  %95 = vmatmul.mubr.f32.gmra.mrb[0].mxu0 %v28
  %v96 = vpop.f32.mrb[0].mxu0
  %v97 = vadd.f32 %v24, %v96
  %v98 = vpop.f32.mrb[0].mxu0
  %99 = vdwg.mxu0
  %v100 = vld [vmem:[%s3] sm:$0x1]
  %v102 = vlaneseq
  %v103 = vshrl.u32 %v102, 7
  %v104 = vsub.s32 0, %v103
  %v105 = vrot.slane %v100, %v104
  %v107 = vadd.f32 %v97, %v105
  %108 = vst [vmem:[%s4] sm:$0xff] %v107
  // Predicated region
  $region18: #{forward.1} parent=0 // pred_check
    _
  $region19: #{forward.1} parent=0 // pred_check_branch
    %110 = sbr.rel (0) target = $region21
  $region20: #{forward.1} parent=0 // pred_region
    _
  $region21: #{forward.1} parent=0 // pred_fallthru
    _
  // Predicated region
  $region22: #{forward.1} parent=0 // pred_check
    _
  $region23: #{forward.1} parent=0 // pred_check_branch
    %112 = sbr.rel (0) target = $region25
  $region24: #{forward.1} parent=0 // pred_region
    _
  $region25: #{forward.1} parent=0 // pred_fallthru
    _

</llo_original>
